<compile_context>
chip_gen: v5e
topology: v5e:2x2
jax: 0.10.0
libtpu: 0.0.40
codegen_flags: <defaults>
</compile_context>

<pallas_src>
import functools

import jax
import jax.numpy as jnp
from jax import lax
from jax.experimental import pallas as pl
from jax.experimental.pallas import tpu as pltpu


def _round_up(x, m):
    return ((x + m - 1) // m) * m


def _label_smoothing_kernel(pred_ref, tgt_ref, out_ref, *, confidence, off_value,
                            num_classes, batch_size):
    """pred_ref: (C, tb) logits block (classes on sublanes, batch on lanes).
       tgt_ref : (1, tb) int32 class indices.
       out_ref : (1, tb) per-sample loss (0 for padded columns)."""
    pred = pred_ref[...].astype(jnp.float32)            # (C, tb) f32
    tgt = tgt_ref[...]                                   # (1, tb) int32
    C, tb = pred.shape

    # log-softmax pieces (reduce over the class/sublane axis).
    m = jnp.max(pred, axis=0, keepdims=True)             # (1, tb)
    lse = jnp.log(jnp.sum(jnp.exp(pred - m), axis=0, keepdims=True))  # (1, tb)

    # sum over classes of logp, without materializing logp:
    #   sum(logp) = sum(pred) - C * (m + lse)
    sum_pred = jnp.sum(pred, axis=0, keepdims=True)       # (1, tb)
    sum_logp = sum_pred - jnp.float32(num_classes) * (m + lse)

    # gathered logit at the target class: compare class-iota (sublane axis)
    # against the target row, select from *pred*, reduce.
    class_ids = lax.broadcasted_iota(jnp.int32, (C, tb), 0)
    gathered = jnp.sum(jnp.where(class_ids == tgt, pred, 0.0),
                       axis=0, keepdims=True)             # (1, tb)
    logp_tgt = gathered - m - lse

    loss = -((jnp.float32(confidence - off_value)) * logp_tgt
             + jnp.float32(off_value) * sum_logp)          # (1, tb)

    # zero out padded batch columns so the wrapper sum is exact.
    col = lax.broadcasted_iota(jnp.int32, (1, tb), 1) + pl.program_id(0) * tb
    out_ref[...] = jnp.where(col < batch_size, loss, 0.0)


def label_smoothing_loss(pred, target, *, classes=10, smoothing=0.0, block_b=512):
    """pred: (B, C) float logits, target: (B,) int class ids -> scalar f32 loss."""
    B, C = pred.shape
    assert C == classes
    confidence = 1.0 - smoothing
    off_value = smoothing / (classes - 1)

    lane = 128
    tb = min(block_b, _round_up(B, lane))   # lane-dense batch tile
    b_pad = _round_up(B, tb)
    grid = (b_pad // tb,)

    # Wrapper-side layout plumbing: batch on lanes, classes on sublanes.
    pred_t = jnp.pad(pred, ((0, b_pad - B), (0, 0))).T            # (C, b_pad)
    tgt_row = jnp.pad(target.astype(jnp.int32), (0, b_pad - B)).reshape(1, b_pad)

    kernel = functools.partial(
        _label_smoothing_kernel,
        confidence=confidence,
        off_value=off_value,
        num_classes=C,
        batch_size=B,
    )

    itemsize = jnp.dtype(pred.dtype).itemsize
    cost = pl.CostEstimate(
        flops=5 * B * C,
        transcendentals=B * C,
        bytes_accessed=b_pad * C * itemsize + 2 * b_pad * 4,
    )

    per_sample = pl.pallas_call(
        kernel,
        out_shape=jax.ShapeDtypeStruct((1, b_pad), jnp.float32),
        grid=grid,
        in_specs=[
            pl.BlockSpec((C, tb), lambda i: (0, i)),   # logits block (classes x batch-tile)
            pl.BlockSpec((1, tb), lambda i: (0, i)),   # lane-dense target indices
        ],
        out_specs=pl.BlockSpec((1, tb), lambda i: (0, i)),  # lane-dense per-sample losses
        compiler_params=pltpu.CompilerParams(
            dimension_semantics=("parallel",),
        ),
        cost_estimate=cost,
    )(pred_t, tgt_row)

    # Final mean over the (unpadded) batch in the wrapper.
    return jnp.sum(per_sample) / jnp.float32(B)


if __name__ == "__main__":
    key = jax.random.PRNGKey(0)
    k_pred, k_tgt = jax.random.split(key)

    B, C = 8, 10
    smoothing = 0.1

    pred = jax.random.normal(k_pred, (B, C), dtype=jnp.float32)
    target = jax.random.randint(k_tgt, (B,), 0, C, dtype=jnp.int32)

    loss = label_smoothing_loss(pred, target, classes=C, smoothing=smoothing)
    jax.block_until_ready(loss)

    # pure-JAX reference (mirrors the PyTorch module exactly)
    logp = jax.nn.log_softmax(pred, axis=-1)
    true_dist = jnp.full((B, C), smoothing / (C - 1), dtype=jnp.float32)
    true_dist = true_dist.at[jnp.arange(B), target].set(1.0 - smoothing)
    ref = jnp.mean(jnp.sum(-true_dist * logp, axis=-1))

    assert jnp.allclose(loss, ref, atol=1e-5, rtol=1e-5), (loss, ref)
    print("KERNEL_OK")
</pallas_src>

<mosaic_0001>
module attributes {stable_mosaic.version = 11 : i64} {
  func.func @_label_smoothing_kernel(%arg0: i32, %arg1: memref<10x128xf32, #tpu.memory_space<vmem>>, %arg2: memref<1x128xi32, #tpu.memory_space<vmem>>, %arg3: memref<1x128xf32, #tpu.memory_space<vmem>>) attributes {dimension_semantics = [#tpu.dimension_semantics<parallel>], iteration_bounds = array<i64: 1>, scalar_prefetch = 0 : i64, scratch_operands = 0 : i64, tpu.core_type = #tpu.core_type<tc>, window_params = [{transform_indices = @transform_0, window_bounds = array<i64: 10, 128>}, {transform_indices = @transform_1, window_bounds = array<i64: 1, 128>}, {transform_indices = @transform_2, window_bounds = array<i64: 1, 128>}]} {
    %c0 = arith.constant 0 : index
    %c0_0 = arith.constant 0 : index
    %0 = vector.load %arg1[%c0, %c0_0] : memref<10x128xf32, #tpu.memory_space<vmem>>, vector<10x128xf32>
    %c0_1 = arith.constant 0 : index
    %c0_2 = arith.constant 0 : index
    %1 = vector.load %arg2[%c0_1, %c0_2] : memref<1x128xi32, #tpu.memory_space<vmem>>, vector<1x128xi32>
    %cst = arith.constant dense<0xFF800000> : vector<128xf32>
    %2 = vector.multi_reduction <maximumf>, %0, %cst [0] : vector<10x128xf32> to vector<128xf32>
    %3 = vector.shape_cast %2 : vector<128xf32> to vector<1x128xf32>
    %4 = vector.broadcast %3 : vector<1x128xf32> to vector<10x128xf32>
    %5 = arith.subf %0, %4 : vector<10x128xf32>
    %6 = math.exp %5 : vector<10x128xf32>
    %cst_3 = arith.constant dense<0.000000e+00> : vector<128xf32>
    %7 = vector.multi_reduction <add>, %6, %cst_3 [0] : vector<10x128xf32> to vector<128xf32>
    %8 = vector.shape_cast %7 : vector<128xf32> to vector<1x128xf32>
    %9 = math.log %8 : vector<1x128xf32>
    %cst_4 = arith.constant dense<0.000000e+00> : vector<128xf32>
    %10 = vector.multi_reduction <add>, %0, %cst_4 [0] : vector<10x128xf32> to vector<128xf32>
    %11 = vector.shape_cast %10 : vector<128xf32> to vector<1x128xf32>
    %12 = arith.addf %3, %9 : vector<1x128xf32>
    %cst_5 = arith.constant 1.000000e+01 : f32
    %13 = vector.broadcast %cst_5 : f32 to vector<1x128xf32>
    %14 = arith.mulf %13, %12 : vector<1x128xf32>
    %15 = arith.subf %11, %14 : vector<1x128xf32>
    %16 = tpu.iota {dimensions = array<i32: 0>} : vector<10x128xi32>
    %17 = vector.broadcast %1 : vector<1x128xi32> to vector<10x128xi32>
    %18 = arith.cmpi eq, %16, %17 : vector<10x128xi32>
    %cst_6 = arith.constant 0.000000e+00 : f32
    %19 = vector.broadcast %cst_6 : f32 to vector<10x128xf32>
    %20 = arith.select %18, %0, %19 : vector<10x128xi1>, vector<10x128xf32>
    %cst_7 = arith.constant dense<0.000000e+00> : vector<128xf32>
    %21 = vector.multi_reduction <add>, %20, %cst_7 [0] : vector<10x128xf32> to vector<128xf32>
    %22 = vector.shape_cast %21 : vector<128xf32> to vector<1x128xf32>
    %23 = arith.subf %22, %3 : vector<1x128xf32>
    %24 = arith.subf %23, %9 : vector<1x128xf32>
    %cst_8 = arith.constant 0.888888895 : f32
    %25 = vector.broadcast %cst_8 : f32 to vector<1x128xf32>
    %26 = arith.mulf %25, %24 : vector<1x128xf32>
    %cst_9 = arith.constant 0.0111111114 : f32
    %27 = vector.broadcast %cst_9 : f32 to vector<1x128xf32>
    %28 = arith.mulf %27, %15 : vector<1x128xf32>
    %29 = arith.addf %26, %28 : vector<1x128xf32>
    %cst_10 = arith.constant 0.000000e+00 : f32
    %30 = vector.broadcast %cst_10 : f32 to vector<1x128xf32>
    %31 = arith.subf %30, %29 : vector<1x128xf32>
    %32 = tpu.iota {dimensions = array<i32: 1>} : vector<1x128xi32>
    %c128_i32 = arith.constant 128 : i32
    %33 = arith.muli %arg0, %c128_i32 : i32
    %34 = vector.broadcast %33 : i32 to vector<1x128xi32>
    %35 = arith.addi %32, %34 : vector<1x128xi32>
    %c8_i32 = arith.constant 8 : i32
    %36 = vector.broadcast %c8_i32 : i32 to vector<1x128xi32>
    %37 = arith.cmpi slt, %35, %36 : vector<1x128xi32>
    %cst_11 = arith.constant 0.000000e+00 : f32
    %38 = vector.broadcast %cst_11 : f32 to vector<1x128xf32>
    %39 = arith.select %37, %31, %38 : vector<1x128xi1>, vector<1x128xf32>
    %c0_12 = arith.constant 0 : index
    %c0_13 = arith.constant 0 : index
    %40 = vector.load %arg3[%c0_12, %c0_13] : memref<1x128xf32, #tpu.memory_space<vmem>>, vector<1x128xf32>
    tpu.vector_store %arg3[%c0_12, %c0_13], %39 {strides = array<i32>} : memref<1x128xf32, #tpu.memory_space<vmem>>, vector<1x128xf32>,
    return
  }
  func.func @transform_0(%arg0: i32) -> (i32, i32) {
    %c0_i32 = arith.constant 0 : i32
    %c0_i32_0 = arith.constant 0 : i32
    return %c0_i32, %arg0 : i32, i32
  }
  func.func @transform_1(%arg0: i32) -> (i32, i32) {
    %c0_i32 = arith.constant 0 : i32
    %c0_i32_0 = arith.constant 0 : i32
    return %c0_i32, %arg0 : i32, i32
  }
  func.func @transform_2(%arg0: i32) -> (i32, i32) {
    %c0_i32 = arith.constant 0 : i32
    %c0_i32_0 = arith.constant 0 : i32
    return %c0_i32, %arg0 : i32, i32
  }
}

</mosaic_0001>

<llo_original>
// kernel: tpu_custom_call.1
$region0: #{tpu_custom_call.1}
  #allocation0 [shape = 'u32[]', space=smem, size = 0x4, offset = 0x4, fixed_abs, tag = 'smem constant byte address 0x4 - core index']
  #allocation1 [shape = 'u32[72,128]{1,0:T(1,128)}', space=vmem, size = 0x9000, scoped, tag = 'internal scratch']
  %s0 = inlined_call_operand.hbm [shape: f32[10,128], index: 0, kind: input, shape index: {}]
  %s1 = inlined_call_operand.hbm [shape: s32[1,128], index: 1, kind: input, shape index: {}]
  %s2 = inlined_call_operand.hbm [shape: f32[1,128], index: 2, kind: output, shape index: {}]
  %s3 = sld [smem:[#allocation0]]
  $region26: #{tpu_custom_call.1} parent=0
    _
  %s5 = ssub.s32 1, %s3
  %s6 = scalar_select 0, %s5, %s3
  $region1: #{tpu_custom_call.1} parent=0
    #allocation2 [shape = 'u8[8192]{0}', space=vmem, size = 0x2000, scoped, tag = 'input window, operand 0, single buffered']
    #allocation3 [shape = 's32[1]{0}', space=sflag, size = 0x4, scoped, tag = 'scoped memory for tpu_custom_call.1']
    #allocation4 [shape = 's32[1]{0}', space=sflag, size = 0x4, scoped, tag = 'scoped memory for tpu_custom_call.1']
    #allocation5 [shape = 'u8[512]{0}', space=vmem, size = 0x400, scoped, tag = 'input window, operand 1, single buffered']
    #allocation6 [shape = 's32[1]{0}', space=sflag, size = 0x4, scoped, tag = 'scoped memory for tpu_custom_call.1']
    #allocation7 [shape = 'u8[512]{0}', space=vmem, size = 0x400, scoped, tag = 'output window, operand 0, single buffered']
    %7 = vsyncpa [#allocation3], 0
    %8 = vsyncpa [#allocation6], 0
    %9 = vsyncpa [#allocation4], 0
    // Predicated region
    $region2: #{tpu_custom_call.1} parent=1 // pred_check
      _
    $region3: #{tpu_custom_call.1} parent=1 // pred_check_branch
      %11 = sbr.rel (0) target = $region5
    $region4: #{tpu_custom_call.1} parent=1 // pred_region
      %13 = vsyncadd [#allocation3], 0
      %s14 = sshll.u32 %s0, 4
      %s15 = int_to_ptr.hbm [resolvable:$true] %s14
      %s16 = sshll.u32 [#allocation2], 4
      %s17 = int_to_ptr.vmem [resolvable:$true] %s16
      %22 = dma.hbm_to_vmem [thread:$0]  %s15, 256, %s17, [#allocation3], 128, 128, 8
    $region5: #{tpu_custom_call.1} parent=1 // pred_fallthru
      _
    // Predicated region
    $region6: #{tpu_custom_call.1} parent=1 // pred_check
      _
    $region7: #{tpu_custom_call.1} parent=1 // pred_check_branch
      %24 = sbr.rel (0) target = $region9
    $region8: #{tpu_custom_call.1} parent=1 // pred_region
      %26 = vsyncadd [#allocation6], 0
      %s28 = sshll.u32 %s1, 4
      %s29 = int_to_ptr.hbm [resolvable:$true] %s28
      %s30 = sshll.u32 [#allocation5], 4
      %s31 = int_to_ptr.vmem [resolvable:$true] %s30
      %33 = dma.hbm_to_vmem [thread:$0]  %s29, 16, %s31, [#allocation6]
    $region9: #{tpu_custom_call.1} parent=1 // pred_fallthru
      _
    // Predicated region
    $region10: #{tpu_custom_call.1} parent=1 // pred_check
      _
    $region11: #{tpu_custom_call.1} parent=1 // pred_check_branch
      %35 = sbr.rel (0) target = $region13
    $region12: #{tpu_custom_call.1} parent=1 // pred_region
      %37 = dma.done [#allocation3], 256
    $region13: #{tpu_custom_call.1} parent=1 // pred_fallthru
      _
    // Predicated region
    $region14: #{tpu_custom_call.1} parent=1 // pred_check
      _
    $region15: #{tpu_custom_call.1} parent=1 // pred_check_branch
      %39 = sbr.rel (0) target = $region17
    $region16: #{tpu_custom_call.1} parent=1 // pred_region
      %41 = dma.done [#allocation6], 16
    $region17: #{tpu_custom_call.1} parent=1 // pred_fallthru
      _
    %v42 = vld [vmem:[#allocation2] sm:$0xff]
    %v43 = vld [vmem:[#allocation2 + $0x8] sm:$0x3]
    %v44 = vld [vmem:[#allocation5] sm:$0x1]
    %vm45 = vcmask 1041408
    %v46 = vsel %vm45, %v43, -inf
    %v47 = vmax.f32 %v42, %v46
    %v48 = vrot.slane %v47, 4
    %v49 = vmax.f32 %v47, %v48
    %v50 = vrot.slane %v49, 2
    %v51 = vmax.f32 %v49, %v50
    %v52 = vrot.slane %v51, 1
    %v53 = vmax.f32 %v51, %v52
    %v54 = vsub.f32 %v42, %v53
    %v55 = vsub.f32 %v43, %v53
    %v56 = vmul.f32 %v54, 1.442695
    %v57 = vpow.pop %v56
    %v58 = vmul.f32 %v55, 1.442695
    %v59 = vpow.pop %v58
    %v60 = vsel %vm45, %v59, 0.0
    %v61 = vadd.f32 %v57, %v60
    %v62 = vrot.slane %v61, 4
    %v63 = vadd.f32 %v61, %v62
    %v64 = vrot.slane %v63, 2
    %v65 = vadd.f32 %v63, %v64
    %v66 = vrot.slane %v65, 1
    %v67 = vadd.f32 %v65, %v66
    %v68 = vlog2.pop %v67
    %v69 = vmul.f32 %v68, 0.6931472
    %v70 = vsel %vm45, %v43, 0.0
    %v71 = vadd.f32 %v42, %v70
    %v72 = vrot.slane %v71, 4
    %v73 = vadd.f32 %v71, %v72
    %v74 = vrot.slane %v73, 2
    %v75 = vadd.f32 %v73, %v74
    %v76 = vrot.slane %v75, 1
    %v77 = vadd.f32 %v75, %v76
    %v78 = vadd.f32 %v53, %v69
    %v79 = vmul.f32 %v78, 10.0
    %v80 = vsub.f32 %v77, %v79
    %v81 = vlaneseq
    %v82 = vshrl.u32 %v81, 7
    %v83 = vadd.s32 %v82, 8
    %v84 = vperm.slane %v44, 0
    %vm85 = vcmp.eq.s32.totalorder %v82, %v84
    %vm86 = vcmp.eq.s32.totalorder %v83, %v84
    %v87 = vsel %vm85, %v42, 0.0
    %v88 = vsel %vm86, %v43, 0.0
    %v89 = vsel %vm45, %v88, 0.0
    %v90 = vadd.f32 %v87, %v89
    %v91 = vrot.slane %v90, 4
    %v92 = vadd.f32 %v90, %v91
    %v93 = vrot.slane %v92, 2
    %v94 = vadd.f32 %v92, %v93
    %v95 = vrot.slane %v94, 1
    %v96 = vadd.f32 %v94, %v95
    %v97 = vsub.f32 %v96, %v53
    %v98 = vsub.f32 %v97, %v69
    %v99 = vmul.f32 %v98, 0.8888889
    %v100 = vmul.f32 %v80, 0.011111111
    %v101 = vadd.f32 %v99, %v100
    %v102 = vsub.f32 0.0, %v101
    %v103 = vlaneseq
    %v104 = vand.u32 %v103, 127
    %s105 = smul.u32 0, 128
    %v106 = vstv %s105
    %v107 = vadd.s32 %v104, %v106
    %vm108 = vcmp.lt.s32.totalorder %v107, 8
    %v109 = vsel %vm108, %v102, 0.0
    %110 = vst [vmem:[#allocation7] sm:$0x1] %v109
    // Predicated region
    $region18: #{tpu_custom_call.1} parent=1 // pred_check
      _
    $region19: #{tpu_custom_call.1} parent=1 // pred_check_branch
      %112 = sbr.rel (0) target = $region21
    $region20: #{tpu_custom_call.1} parent=1 // pred_region
      %114 = vsyncadd [#allocation4], 0
      %s116 = sshll.u32 [#allocation7], 4
      %s117 = int_to_ptr.vmem [resolvable:$true] %s116
      %s118 = sshll.u32 %s2, 4
      %s119 = int_to_ptr.hbm [resolvable:$true] %s118
      %121 = dma.vmem_to_hbm [thread:$0]  %s117, 16, %s119, [#allocation4]
    $region21: #{tpu_custom_call.1} parent=1 // pred_fallthru
      _
    // Predicated region
    $region22: #{tpu_custom_call.1} parent=1 // pred_check
      _
    $region23: #{tpu_custom_call.1} parent=1 // pred_check_branch
      %123 = sbr.rel (0) target = $region25
    $region24: #{tpu_custom_call.1} parent=1 // pred_region
      %125 = dma.done [#allocation4], 16
    $region25: #{tpu_custom_call.1} parent=1 // pred_fallthru
      _
    %126 = vsyncpa [#allocation3], 1
    %127 = vsyncpa [#allocation6], 1
    %128 = vsyncpa [#allocation4], 1

</llo_original>
